<compile_context>
chip_gen: v7x
topology: tpu7x:2x2x1
jax: 0.10.0
libtpu: 0.0.40
codegen_flags: <defaults>
</compile_context>

<pallas_src>
import math

import jax
import jax.numpy as jnp
from jax.experimental import pallas as pl
from jax.experimental.pallas import tpu as pltpu


# ----------------------------------------------------------------------------
# helpers
# ----------------------------------------------------------------------------
def _round_up(v: int, m: int) -> int:
    return ((v + m - 1) // m) * m


def _sublane_align(dtype) -> int:
    # sublane packing: 8 rows for 32-bit, 16 for 16-bit, 32 for 8-bit dtypes.
    return max(8, 32 // jnp.dtype(dtype).itemsize)


def _pick_tile(dim: int, pref: int, align: int):
    """Return (tile, padded_dim): padded_dim % tile == 0, tile % align == 0."""
    pref = _round_up(max(pref, align), align)
    base = _round_up(max(dim, align), align)      # minimal padded size
    if base <= pref:
        return base, base
    # choose tile <= pref minimizing total padding, preferring larger tiles
    best_tile, best_padded = align, _round_up(base, align)
    for t in range(pref, align - 1, -align):
        p = _round_up(base, t)
        if p < best_padded or (p == best_padded and t > best_tile):
            best_tile, best_padded = t, p
    return best_tile, best_padded


def _vmem_footprint(tm, tn, tk, in_sz, out_sz, needs_acc):
    """Double-buffered VMEM footprint estimate (bytes) for one grid step."""
    x_tile = tm * tk * in_sz
    w_tile = tk * tn * in_sz
    b_tile = tn * 4
    o_tile = tm * tn * out_sz
    acc = tm * tn * 4 if needs_acc else 0
    return 2 * (x_tile + w_tile + b_tile + o_tile) + acc


# ----------------------------------------------------------------------------
# kernels
# ----------------------------------------------------------------------------
def _matmul_bias_kernel(x_ref, w_ref, b_ref, o_ref):
    """Single K block: one MXU pass, no accumulator scratch needed."""
    acc = jnp.dot(x_ref[...], w_ref[...], preferred_element_type=jnp.float32)
    o_ref[...] = (acc + b_ref[...]).astype(o_ref.dtype)


def _matmul_bias_acc_kernel(x_ref, w_ref, b_ref, o_ref, acc_ref):
    """K split over grid axis 2: f32 accumulate, bias + writeback on last k."""
    k = pl.program_id(2)

    @pl.when(k == 0)
    def _():
        acc_ref[...] = jnp.zeros_like(acc_ref)

    acc_ref[...] += jnp.dot(
        x_ref[...], w_ref[...], preferred_element_type=jnp.float32)

    @pl.when(k == pl.num_programs(2) - 1)
    def _():
        o_ref[...] = (acc_ref[...] + b_ref[...]).astype(o_ref.dtype)


# ----------------------------------------------------------------------------
# layer (parameters padded / cast once at construction)
# ----------------------------------------------------------------------------
class PallasConv1D:
    """y = x @ W + b with W of shape (nx, nf); matches torch Conv1D.forward."""

    def __init__(self, weight, bias, *, compute_dtype=jnp.bfloat16,
                 out_dtype=None, tm_pref=512, tn_pref=512, tk_pref=2048,
                 vmem_budget_bytes=24 * 1024 * 1024):
        nx, nf = int(weight.shape[0]), int(weight.shape[1])
        assert bias.shape == (nf,)
        self.nx, self.nf = nx, nf
        self.compute_dtype = jnp.dtype(compute_dtype)
        self.out_dtype = (jnp.dtype(out_dtype) if out_dtype is not None
                          else self.compute_dtype)
        self.m_align = _sublane_align(self.compute_dtype)
        self.tm_pref = _round_up(max(tm_pref, self.m_align), self.m_align)

        in_sz = self.compute_dtype.itemsize
        out_sz = self.out_dtype.itemsize

        # Choose K / N tiling once (independent of the per-call M).  Shrink tk
        # first, then tn, until the double-buffered footprint at the largest M
        # tile fits the VMEM budget (safe for v7x's 64 MiB/TC as well).
        tk_pref_c, tn_pref_c = tk_pref, tn_pref
        while True:
            tk, Kp = _pick_tile(nx, tk_pref_c, 128)
            tn, Np = _pick_tile(nf, tn_pref_c, 128)
            fp = _vmem_footprint(self.tm_pref, tn, tk, in_sz, out_sz, Kp != tk)
            if fp <= vmem_budget_bytes or (tk <= 256 and tn <= 256):
                break
            if tk > 256:
                tk_pref_c = max(256, tk // 2)
            else:
                tn_pref_c = max(256, tn // 2)
        self.tk, self.Kp = tk, Kp
        self.tn, self.Np = tn, Np

        # Pre-pad / pre-cast parameters ONCE (not on every forward call).
        if (Kp, Np) == (nx, nf):
            w_p = weight.astype(self.compute_dtype)
        else:
            w_p = jnp.zeros((Kp, Np), self.compute_dtype).at[:nx, :nf].set(
                weight.astype(self.compute_dtype))
        if Np == nf:
            b_p = bias.astype(jnp.float32).reshape(1, nf)
        else:
            b_p = jnp.zeros((1, Np), jnp.float32).at[0, :nf].set(
                bias.astype(jnp.float32))
        self.w_p, self.b_p = w_p, b_p

    def __call__(self, x):
        nx, nf = self.nx, self.nf
        assert x.shape[-1] == nx
        orig_lead = x.shape[:-1]
        M = int(math.prod(orig_lead)) if orig_lead else 1
        x2 = x.reshape(M, nx)

        tm, Mp = _pick_tile(M, self.tm_pref, self.m_align)
        tk, Kp = self.tk, self.Kp
        tn, Np = self.tn, self.Np

        # Pad/cast the activation only when actually required.
        if (Mp, Kp) == (M, nx):
            x_p = (x2 if x2.dtype == self.compute_dtype
                   else x2.astype(self.compute_dtype))
        else:
            x_p = jnp.zeros((Mp, Kp), self.compute_dtype).at[:M, :nx].set(
                x2.astype(self.compute_dtype))

        in_sz = self.compute_dtype.itemsize
        out_sz = self.out_dtype.itemsize
        fp = _vmem_footprint(tm, tn, tk, in_sz, out_sz, Kp != tk)
        vmem_limit = int(min(48 * 1024 * 1024, max(32 * 1024 * 1024, 2 * fp)))
        cost = pl.CostEstimate(
            flops=2 * Mp * Kp * Np,
            transcendentals=0,
            bytes_accessed=(Mp * Kp + Kp * Np) * in_sz + Mp * Np * out_sz + Np * 4)

        if Kp == tk:
            # Whole K in one tile: single-pass kernel, no reduction axis,
            # no accumulator scratch.
            grid = (Mp // tm, Np // tn)
            out_p = pl.pallas_call(
                _matmul_bias_kernel,
                out_shape=jax.ShapeDtypeStruct((Mp, Np), self.out_dtype),
                grid_spec=pltpu.PrefetchScalarGridSpec(
                    num_scalar_prefetch=0,
                    grid=grid,
                    in_specs=[
                        pl.BlockSpec((tm, Kp), lambda i, j: (i, 0)),   # x
                        pl.BlockSpec((Kp, tn), lambda i, j: (0, j)),   # W
                        pl.BlockSpec((1, tn), lambda i, j: (0, j)),    # b
                    ],
                    out_specs=pl.BlockSpec((tm, tn), lambda i, j: (i, j)),
                ),
                compiler_params=pltpu.CompilerParams(
                    dimension_semantics=("parallel", "parallel"),
                    vmem_limit_bytes=vmem_limit),
                cost_estimate=cost,
            )(x_p, self.w_p, self.b_p)
        else:
            grid = (Mp // tm, Np // tn, Kp // tk)
            out_p = pl.pallas_call(
                _matmul_bias_acc_kernel,
                out_shape=jax.ShapeDtypeStruct((Mp, Np), self.out_dtype),
                grid_spec=pltpu.PrefetchScalarGridSpec(
                    num_scalar_prefetch=0,
                    grid=grid,
                    in_specs=[
                        pl.BlockSpec((tm, tk), lambda i, j, k: (i, k)),  # x
                        pl.BlockSpec((tk, tn), lambda i, j, k: (k, j)),  # W
                        pl.BlockSpec((1, tn), lambda i, j, k: (0, j)),   # b
                    ],
                    out_specs=pl.BlockSpec((tm, tn), lambda i, j, k: (i, j)),
                    scratch_shapes=[pltpu.VMEM((tm, tn), jnp.float32)],
                ),
                compiler_params=pltpu.CompilerParams(
                    dimension_semantics=("parallel", "parallel", "arbitrary"),
                    vmem_limit_bytes=vmem_limit),
                cost_estimate=cost,
            )(x_p, self.w_p, self.b_p)

        out = out_p if (Mp, Np) == (M, nf) else out_p[:M, :nf]
        return out.reshape(*orig_lead, nf)


# ----------------------------------------------------------------------------
# functional convenience wrapper (with tiny-problem fallback)
# ----------------------------------------------------------------------------
def conv1d(x, weight, bias, *, compute_dtype=jnp.bfloat16, out_dtype=None,
           allow_fallback=True, **layer_kwargs):
    """One-shot functional API.  NOTE: re-pads/casts the weight every call;
    for repeated use construct a PallasConv1D once instead."""
    nx, nf = int(weight.shape[0]), int(weight.shape[1])
    M = int(math.prod(x.shape[:-1])) if x.ndim > 1 else 1
    out_dt = jnp.dtype(out_dtype) if out_dtype is not None else jnp.dtype(compute_dtype)
    if allow_fallback and (M * nx * nf) < (1 << 16):
        # Tiny problem: padding + launch overhead dominates; let XLA fuse it.
        y = (x.reshape(M, nx).astype(jnp.float32) @ weight.astype(jnp.float32)
             + bias.astype(jnp.float32))
        return y.astype(out_dt).reshape(*x.shape[:-1], nf)
    layer = PallasConv1D(weight, bias, compute_dtype=compute_dtype,
                         out_dtype=out_dtype, **layer_kwargs)
    return layer(x)


def conv1d_reference(x, weight, bias):
    M = int(math.prod(x.shape[:-1]))
    y = (x.reshape(M, x.shape[-1]).astype(jnp.float32)
         @ weight.astype(jnp.float32) + bias.astype(jnp.float32))
    return y.reshape(*x.shape[:-1], weight.shape[-1])


# ----------------------------------------------------------------------------
# demo / self-test
# ----------------------------------------------------------------------------
if __name__ == "__main__":
    key = jax.random.PRNGKey(0)
    kx, kw, kb, kx2, kw2, kb2 = jax.random.split(key, 6)

    # ---- tiny, unaligned shape (exercises the padding path) ----------------
    B, S, NX, NF = 2, 8, 32, 64
    x = jax.random.normal(kx, (B, S, NX), dtype=jnp.float32)
    weight = (0.02 * jax.random.normal(kw, (NX, NF))).astype(jnp.float32)
    # torch inits bias to zeros; use a nonzero bias so the bias path is real.
    bias = (0.1 * jax.random.normal(kb, (NF,))).astype(jnp.float32)
    ref = conv1d_reference(x, weight, bias)

    # f32 debug path (exact vs reference), Pallas kernel forced.
    layer_f32 = PallasConv1D(weight, bias, compute_dtype=jnp.float32)
    out_f32 = jax.block_until_ready(layer_f32(x))
    assert out_f32.shape == (B, S, NF)
    assert jnp.allclose(out_f32, ref, atol=1e-5, rtol=1e-5), (
        f"f32 max abs err {jnp.max(jnp.abs(out_f32 - ref))}")

    # bf16 default path (MXU-native inputs, f32 accumulation, bf16 output).
    layer_bf16 = PallasConv1D(weight, bias)
    out_bf16 = jax.block_until_ready(layer_bf16(x))
    assert out_bf16.dtype == jnp.bfloat16
    assert jnp.allclose(out_bf16.astype(jnp.float32), ref,
                        atol=3e-2, rtol=3e-2), (
        f"bf16 max abs err {jnp.max(jnp.abs(out_bf16.astype(jnp.float32) - ref))}")

    # ---- 128-aligned shape: zero-copy fast path, single-K-block kernel -----
    B2, S2, NX2, NF2 = 4, 32, 256, 256
    x2 = jax.random.normal(kx2, (B2, S2, NX2), dtype=jnp.bfloat16)
    w2 = (0.02 * jax.random.normal(kw2, (NX2, NF2))).astype(jnp.bfloat16)
    b2 = (0.1 * jax.random.normal(kb2, (NF2,))).astype(jnp.float32)
    ref2 = conv1d_reference(x2, w2, b2)
    layer2 = PallasConv1D(w2, b2)
    out2 = jax.block_until_ready(layer2(x2))
    assert out2.shape == (B2, S2, NF2)
    assert jnp.allclose(out2.astype(jnp.float32), ref2,
                        atol=3e-2, rtol=3e-2), (
        f"aligned bf16 max abs err "
        f"{jnp.max(jnp.abs(out2.astype(jnp.float32) - ref2))}")

    # functional API with tiny-problem fallback (plain fused matmul).
    out_fb = jax.block_until_ready(
        conv1d(x, weight, bias, compute_dtype=jnp.float32,
               out_dtype=jnp.float32))
    assert jnp.allclose(out_fb, ref, atol=1e-5, rtol=1e-5)

    print("KERNEL_OK")
</pallas_src>

<mosaic_0001>
module attributes {stable_mosaic.version = 11 : i64} {
  func.func @_matmul_bias_kernel(%arg0: i32, %arg1: i32, %arg2: memref<16x128xf32, #tpu.memory_space<vmem>>, %arg3: memref<128x128xf32, #tpu.memory_space<vmem>>, %arg4: memref<1x128xf32, #tpu.memory_space<vmem>>, %arg5: memref<16x128xf32, #tpu.memory_space<vmem>>) attributes {dimension_semantics = [#tpu.dimension_semantics<parallel>, #tpu.dimension_semantics<parallel>], iteration_bounds = array<i64: 1, 1>, scalar_prefetch = 0 : i64, scratch_operands = 0 : i64, tpu.core_type = #tpu.core_type<tc>, window_params = [{transform_indices = @transform_0, window_bounds = array<i64: 16, 128>}, {transform_indices = @transform_1, window_bounds = array<i64: 128, 128>}, {transform_indices = @transform_2, window_bounds = array<i64: 1, 128>}, {transform_indices = @transform_3, window_bounds = array<i64: 16, 128>}]} {
    %c0 = arith.constant 0 : index
    %c0_0 = arith.constant 0 : index
    %0 = vector.load %arg2[%c0, %c0_0] : memref<16x128xf32, #tpu.memory_space<vmem>>, vector<16x128xf32>
    %c0_1 = arith.constant 0 : index
    %c0_2 = arith.constant 0 : index
    %1 = vector.load %arg3[%c0_1, %c0_2] : memref<128x128xf32, #tpu.memory_space<vmem>>, vector<128x128xf32>
    %cst = arith.constant dense<0.000000e+00> : vector<16x128xf32>
    %2 = tpu.matmul %0, %1, %cst {dimension_numbers = #tpu.dot_dimension_numbers<[1], [0], [0], [1], [0, 0, 1, 1], [], []>} : vector<16x128xf32>, vector<128x128xf32>, vector<16x128xf32> -> vector<16x128xf32>
    %c0_3 = arith.constant 0 : index
    %c0_4 = arith.constant 0 : index
    %3 = vector.load %arg4[%c0_3, %c0_4] : memref<1x128xf32, #tpu.memory_space<vmem>>, vector<1x128xf32>
    %4 = vector.broadcast %3 : vector<1x128xf32> to vector<16x128xf32>
    %5 = arith.addf %2, %4 : vector<16x128xf32>
    %c0_5 = arith.constant 0 : index
    %c0_6 = arith.constant 0 : index
    %6 = vector.load %arg5[%c0_5, %c0_6] : memref<16x128xf32, #tpu.memory_space<vmem>>, vector<16x128xf32>
    tpu.vector_store %arg5[%c0_5, %c0_6], %5 {strides = array<i32>} : memref<16x128xf32, #tpu.memory_space<vmem>>, vector<16x128xf32>,
    return
  }
  func.func @transform_0(%arg0: i32, %arg1: i32) -> (i32, i32) {
    %c0_i32 = arith.constant 0 : i32
    %c0_i32_0 = arith.constant 0 : i32
    return %arg0, %c0_i32 : i32, i32
  }
  func.func @transform_1(%arg0: i32, %arg1: i32) -> (i32, i32) {
    %c0_i32 = arith.constant 0 : i32
    %c0_i32_0 = arith.constant 0 : i32
    return %c0_i32, %arg1 : i32, i32
  }
  func.func @transform_2(%arg0: i32, %arg1: i32) -> (i32, i32) {
    %c0_i32 = arith.constant 0 : i32
    %c0_i32_0 = arith.constant 0 : i32
    return %c0_i32, %arg1 : i32, i32
  }
  func.func @transform_3(%arg0: i32, %arg1: i32) -> (i32, i32) {
    %c0_i32 = arith.constant 0 : i32
    return %arg0, %arg1 : i32, i32
  }
}

</mosaic_0001>

<llo_original>
// kernel: tpu_custom_call.1
$region0: #{tpu_custom_call.1}
  #allocation0 [shape = 'u32[]', space=smem, size = 0x4, offset = 0x4, fixed_abs, tag = 'smem constant byte address 0x4 - core index']
  #allocation1 [shape = 'u32[144,128]{1,0:T(1,128)}', space=vmem, size = 0x12000, scoped, tag = 'internal scratch']
  %s0 = inlined_call_operand.hbm [shape: f32[16,128], index: 0, kind: input, shape index: {}]
  %s1 = inlined_call_operand.hbm [shape: f32[128,128], index: 1, kind: input, shape index: {}]
  %s2 = inlined_call_operand.vmem [shape: f32[1,128], index: 2, kind: input, shape index: {}]
  %s3 = inlined_call_operand.hbm [shape: f32[16,128], index: 3, kind: output, shape index: {}]
  %s4 = sld [smem:[#allocation0]]
  $region30: #{tpu_custom_call.1} parent=0
    _
  %s6 = ssub.s32 1, %s4
  %s7 = scalar_select 0, %s6, %s4
  $region1: #{tpu_custom_call.1} parent=0
    #allocation2 [shape = 'u8[8192]{0}', space=vmem, size = 0x2000, scoped, tag = 'input window, operand 0, single buffered']
    #allocation3 [shape = 's32[1]{0}', space=sflag, size = 0x4, scoped, tag = 'scoped memory for tpu_custom_call.1']
    #allocation4 [shape = 's32[1]{0}', space=sflag, size = 0x4, scoped, tag = 'scoped memory for tpu_custom_call.1']
    #allocation5 [shape = 'u8[65536]{0}', space=vmem, size = 0x10000, scoped, tag = 'input window, operand 1, single buffered']
    #allocation6 [shape = 's32[1]{0}', space=sflag, size = 0x4, scoped, tag = 'scoped memory for tpu_custom_call.1']
    #allocation7 [shape = 'u8[8192]{0}', space=vmem, size = 0x2000, scoped, tag = 'output window, operand 0, single buffered']
    %8 = vsyncpa [#allocation3], 0
    %9 = vsyncpa [#allocation6], 0
    %10 = vsyncpa [#allocation4], 0
    // Predicated region
    $region2: #{tpu_custom_call.1} parent=1 // pred_check
      _
    $region3: #{tpu_custom_call.1} parent=1 // pred_check_branch
      %12 = sbr.rel (0) target = $region5
    $region4: #{tpu_custom_call.1} parent=1 // pred_region
      %s14 = ssub.s32 256, 256
      %15 = vsyncadd [#allocation3], %s14
      %s16 = sshll.u32 [#allocation2], 4
      %s17 = int_to_ptr.vmem [resolvable:$true] %s16
      %22 = dma.hbm_to_vmem [thread:$0]  %s0, 256, %s17, [#allocation3], 128, 128, 8
    $region5: #{tpu_custom_call.1} parent=1 // pred_fallthru
      _
    // Predicated region
    $region6: #{tpu_custom_call.1} parent=1 // pred_check
      _
    $region7: #{tpu_custom_call.1} parent=1 // pred_check_branch
      %24 = sbr.rel (0) target = $region9
    $region8: #{tpu_custom_call.1} parent=1 // pred_region
      %s26 = ssub.s32 2048, 2048
      %27 = vsyncadd [#allocation6], %s26
      %s28 = sshll.u32 [#allocation5], 4
      %s29 = int_to_ptr.vmem [resolvable:$true] %s28
      %34 = dma.hbm_to_vmem [thread:$0]  %s1, 2048, %s29, [#allocation6], 128, 128, 8
    $region9: #{tpu_custom_call.1} parent=1 // pred_fallthru
      _
    // Predicated region
    $region10: #{tpu_custom_call.1} parent=1 // pred_check
      _
    $region11: #{tpu_custom_call.1} parent=1 // pred_check_branch
      %36 = sbr.rel (0) target = $region13
    $region12: #{tpu_custom_call.1} parent=1 // pred_region
      _
    $region13: #{tpu_custom_call.1} parent=1 // pred_fallthru
      _
    // Predicated region
    $region14: #{tpu_custom_call.1} parent=1 // pred_check
      _
    $region15: #{tpu_custom_call.1} parent=1 // pred_check_branch
      %38 = sbr.rel (0) target = $region17
    $region16: #{tpu_custom_call.1} parent=1 // pred_region
      %39 = dma.done [#allocation3], 256
    $region17: #{tpu_custom_call.1} parent=1 // pred_fallthru
      _
    // Predicated region
    $region18: #{tpu_custom_call.1} parent=1 // pred_check
      _
    $region19: #{tpu_custom_call.1} parent=1 // pred_check_branch
      %41 = sbr.rel (0) target = $region21
    $region20: #{tpu_custom_call.1} parent=1 // pred_region
      %42 = dma.done [#allocation6], 2048
    $region21: #{tpu_custom_call.1} parent=1 // pred_fallthru
      _
    %v43 = vld [vmem:[#allocation2] sm:$0xff]
    %v44 = vld [vmem:[#allocation2 + $0x8] sm:$0xff]
    %v45 = vld [vmem:[#allocation5] sm:$0xff]
    %v46 = vld [vmem:[#allocation5 + $0x8] sm:$0xff]
    %v47 = vld [vmem:[#allocation5 + $0x10] sm:$0xff]
    %v48 = vld [vmem:[#allocation5 + $0x18] sm:$0xff]
    %v49 = vld [vmem:[#allocation5 + $0x20] sm:$0xff]
    %v50 = vld [vmem:[#allocation5 + $0x28] sm:$0xff]
    %v51 = vld [vmem:[#allocation5 + $0x30] sm:$0xff]
    %v52 = vld [vmem:[#allocation5 + $0x38] sm:$0xff]
    %v53 = vld [vmem:[#allocation5 + $0x40] sm:$0xff]
    %v54 = vld [vmem:[#allocation5 + $0x48] sm:$0xff]
    %v55 = vld [vmem:[#allocation5 + $0x50] sm:$0xff]
    %v56 = vld [vmem:[#allocation5 + $0x58] sm:$0xff]
    %v57 = vld [vmem:[#allocation5 + $0x60] sm:$0xff]
    %v58 = vld [vmem:[#allocation5 + $0x68] sm:$0xff]
    %v59 = vld [vmem:[#allocation5 + $0x70] sm:$0xff]
    %v60 = vld [vmem:[#allocation5 + $0x78] sm:$0xff]
    %v61 = vld [vmem:[%s2] sm:$0x1]
    %v63 = vlaneseq
    %v64 = vshrl.u32 %v63, 7
    %v65 = vsub.s32 0, %v64
    %v66 = vrot.slane %v61, %v65
    %68 = vmatprep.subr.mxu0 0.0
    %69 = vmatpush1.msra.mxu0 %v45
    %70 = vmatprep.subr.mxu0 0.0
    %71 = vmatpush1.msra.mxu0 %v46
    %72 = vmatprep.subr.mxu0 0.0
    %73 = vmatpush1.msra.mxu0 %v47
    %74 = vmatprep.subr.mxu0 0.0
    %75 = vmatpush1.msra.mxu0 %v48
    %76 = vmatprep.subr.mxu0 0.0
    %77 = vmatpush1.msra.mxu0 %v49
    %78 = vmatprep.subr.mxu0 0.0
    %79 = vmatpush1.msra.mxu0 %v50
    %80 = vmatprep.subr.mxu0 0.0
    %81 = vmatpush1.msra.mxu0 %v51
    %82 = vmatprep.subr.mxu0 0.0
    %83 = vmatpush1.msra.mxu0 %v52
    %84 = vmatprep.subr.mxu0 0.0
    %85 = vmatpush1.msra.mxu0 %v53
    %86 = vmatprep.subr.mxu0 0.0
    %87 = vmatpush1.msra.mxu0 %v54
    %88 = vmatprep.subr.mxu0 0.0
    %89 = vmatpush1.msra.mxu0 %v55
    %90 = vmatprep.subr.mxu0 0.0
    %91 = vmatpush1.msra.mxu0 %v56
    %92 = vmatprep.subr.mxu0 0.0
    %93 = vmatpush1.msra.mxu0 %v57
    %94 = vmatprep.subr.mxu0 0.0
    %95 = vmatpush1.msra.mxu0 %v58
    %96 = vmatprep.subr.mxu0 0.0
    %97 = vmatpush1.msra.mxu0 %v59
    %98 = vmatprep.subr.mxu0 0.0
    %99 = vmatpush1.msra.mxu0 %v60
    %100 = vmatprep.subr.mxu0 0.0
    %101 = vmatpush1.msra.mxu0 0.0
    %102 = vmatprep.subr.mxu0 0.0
    %103 = vmatpush1.msra.mxu0 0.0
    %104 = vmatprep.subr.mxu0 0.0
    %105 = vmatpush1.msra.mxu0 0.0
    %106 = vmatprep.subr.mxu0 0.0
    %107 = vmatpush1.msra.mxu0 0.0
    %108 = vmatprep.subr.mxu0 0.0
    %109 = vmatpush1.msra.mxu0 0.0
    %110 = vmatprep.subr.mxu0 0.0
    %111 = vmatpush1.msra.mxu0 0.0
    %112 = vmatprep.subr.mxu0 0.0
    %113 = vmatpush1.msra.mxu0 0.0
    %114 = vmatprep.subr.mxu0 0.0
    %115 = vmatpush1.msra.mxu0 0.0
    %116 = vmatprep.subr.mxu0 0.0
    %117 = vmatpush1.msra.mxu0 0.0
    %118 = vmatprep.subr.mxu0 0.0
    %119 = vmatpush1.msra.mxu0 0.0
    %120 = vmatprep.subr.mxu0 0.0
    %121 = vmatpush1.msra.mxu0 0.0
    %122 = vmatprep.subr.mxu0 0.0
    %123 = vmatpush1.msra.mxu0 0.0
    %124 = vmatprep.subr.mxu0 0.0
    %125 = vmatpush1.msra.mxu0 0.0
    %126 = vmatprep.subr.mxu0 0.0
    %127 = vmatpush1.msra.mxu0 0.0
    %128 = vmatprep.subr.mxu0 0.0
    %129 = vmatpush1.msra.mxu0 0.0
    %130 = vmatprep.subr.mxu0 0.0
    %131 = vmatpush1.msra.mxu0 0.0
    %132 = vmatprep.mubr.f32.mxu0 0.0
    %133 = vmatmul.mubr.f32.gmra.mrb[0].mxu0 %v43
    %v134 = vpop.f32.mrb[0].mxu0
    %v135 = vadd.f32 %v66, %v134
    %v136 = vpop.f32.mrb[0].mxu0
    %137 = vmatprep.mubr.f32.mxu0 0.0
    %138 = vmatmul.mubr.f32.gmra.mrb[0].mxu0 %v44
    %v139 = vpop.f32.mrb[0].mxu0
    %v140 = vadd.f32 %v66, %v139
    %v141 = vpop.f32.mrb[0].mxu0
    %142 = vdwg.mxu0
    %143 = vst [vmem:[#allocation7] sm:$0xff] %v135
    %144 = vst [vmem:[#allocation7 + $0x8] sm:$0xff] %v140
    // Predicated region
    $region22: #{tpu_custom_call.1} parent=1 // pred_check
      _
    $region23: #{tpu_custom_call.1} parent=1 // pred_check_branch
      %146 = sbr.rel (0) target = $region25
    $region24: #{tpu_custom_call.1} parent=1 // pred_region
      %s148 = ssub.s32 256, 256
      %149 = vsyncadd [#allocation4], %s148
      %s150 = sshll.u32 [#allocation7], 4
      %s151 = int_to_ptr.vmem [resolvable:$true] %s150
      %156 = dma.vmem_to_hbm [thread:$0]  %s151, 256, %s3, [#allocation4], 128, 128, 8
    $region25: #{tpu_custom_call.1} parent=1 // pred_fallthru
      _
    // Predicated region
    $region26: #{tpu_custom_call.1} parent=1 // pred_check
      _
    $region27: #{tpu_custom_call.1} parent=1 // pred_check_branch
      %158 = sbr.rel (0) target = $region29
    $region28: #{tpu_custom_call.1} parent=1 // pred_region
      %159 = dma.done [#allocation4], 256
    $region29: #{tpu_custom_call.1} parent=1 // pred_fallthru
      _
    %160 = vsyncpa [#allocation3], 1
    %161 = vsyncpa [#allocation6], 1
    %162 = vsyncpa [#allocation4], 1

</llo_original>
